<compile_context>
chip_gen: v6e
topology: v6e:2x2x1
jax: 0.10.0
libtpu: 0.0.40
codegen_flags: <defaults>
</compile_context>

<pallas_src>
import jax
import jax.numpy as jnp
from jax.experimental import pallas as pl
from jax.experimental.pallas import tpu as pltpu


def pooler_kernel(x_ref, w_ref, b_ref, o_ref):
    # x_ref: (TB, H)        first-token activations (compute dtype, resident across N tiles)
    # w_ref: (H, TN)        pre-transposed [in, out] weight tile -> plain (M,K)x(K,N) MXU op
    # b_ref: (n_tiles, TN)  full bias, resident (constant index map => single DMA)
    # o_ref: (TB, TN)
    y = jnp.dot(x_ref[...], w_ref[...], preferred_element_type=jnp.float32)
    b = b_ref[pl.ds(pl.program_id(0), 1), :].astype(jnp.float32)   # (1, TN) row for this N tile
    o_ref[...] = jnp.tanh(y + b).astype(o_ref.dtype)


def prepare_pooler_params(weight, bias, compute_dtype=jnp.bfloat16):
    """One-time parameter prep: nn.Linear W [out, in] -> W^T [in, out] in compute dtype.

    Done outside the kernel so it is amortized at parameter-load time; the kernel then
    runs a standard (M,K)x(K,N) contraction with no on-chip transpose.
    """
    return weight.T.astype(compute_dtype), bias.astype(jnp.float32)


def _pick_tn(H, dtype_bytes):
    # Largest lane-aligned (multiple-of-128) tile dividing H that yields >= 2 tiles
    # (preferring an even tile count so both v7x TensorCores get equal work) while
    # keeping the double-buffered weight tile well under the VMEM budget.
    best = None
    for cand in (1024, 512, 384, 256, 128):
        if H % cand or H // cand < 2:
            continue
        if 2 * cand * H * dtype_bytes > 24 * 1024 * 1024:
            continue
        if (H // cand) % 2 == 0:
            return cand
        if best is None:
            best = cand
    return best if best is not None else H   # toy / non-128-multiple H: single full block


def _pick_tb(B):
    if B <= 256:
        return B
    for cand in (256, 128, 64, 32, 16, 8):
        if B % cand == 0:
            return cand
    return B   # TODO(synk): pad ragged large batches instead of keeping x whole.


def bert_pooler(hidden_states, weight, bias, *, tn=None, tb=None,
                compute_dtype=jnp.bfloat16, w_buffers=None):
    """hidden_states: [B, S, H]; weight: [H, H] (out, in); bias: [H] -> returns [B, H]."""
    # TODO(synk): fuse the strided first-token slice into the pallas_call via a size-1
    # seq block once short-seq second-minor blocks are safe; kept in XLA for now.
    first_token = hidden_states[:, 0]                    # [B, H]
    B, H = first_token.shape
    out_dtype = hidden_states.dtype

    w_t, bias_f32 = prepare_pooler_params(weight, bias, compute_dtype)
    x = first_token.astype(compute_dtype)

    cbytes = jnp.dtype(compute_dtype).itemsize
    obytes = jnp.dtype(out_dtype).itemsize

    if tn is None:
        tn = _pick_tn(H, cbytes)
    assert H % tn == 0, (H, tn)
    n_tiles = H // tn

    if tb is None:
        tb = _pick_tb(B)
    assert B % tb == 0, (B, tb)
    nb = B // tb

    bias2d = bias_f32.reshape(n_tiles, tn)

    # True per-step VMEM footprint (double-buffered x/W/out + resident bias) plus
    # headroom; deliberately capped at 48 MiB (below v7x's 64 MiB physical VMEM).
    need = (2 * tb * H + 2 * H * tn) * cbytes + n_tiles * tn * 4 + 2 * tb * tn * obytes
    vmem_limit = int(min(max(4 * need, 32 * 1024 * 1024), 48 * 1024 * 1024))

    cost = pl.CostEstimate(
        flops=2 * B * H * H,
        transcendentals=B * H,
        bytes_accessed=cbytes * (H * H + B * H * n_tiles) + 4 * H + obytes * B * H,
    )

    w_spec_kwargs = {}
    if w_buffers is not None and w_buffers != 2:
        # v5e escape hatch: deeper weight pipelining if the W DMA is still exposed.
        w_spec_kwargs["pipeline_mode"] = pl.Buffered(w_buffers)

    return pl.pallas_call(
        pooler_kernel,
        out_shape=jax.ShapeDtypeStruct((B, H), out_dtype),
        grid_spec=pltpu.PrefetchScalarGridSpec(
            num_scalar_prefetch=0,
            grid=(n_tiles, nb),                               # (N tiles, B tiles)
            in_specs=[
                pl.BlockSpec((tb, H), lambda j, i: (i, 0)),           # x: per B tile
                pl.BlockSpec((H, tn), lambda j, i: (0, j),            # W^T: streamed per N tile,
                             **w_spec_kwargs),                        #      held while B tiles vary
                pl.BlockSpec((n_tiles, tn), lambda j, i: (0, 0)),     # bias: fully resident
            ],
            out_specs=pl.BlockSpec((tb, tn), lambda j, i: (i, j)),
        ),
        compiler_params=pltpu.CompilerParams(
            dimension_semantics=("parallel", "parallel"),
            vmem_limit_bytes=vmem_limit,
        ),
        cost_estimate=cost,
    )(x, w_t, bias2d)


if __name__ == "__main__":
    key = jax.random.PRNGKey(0)
    k1, k2, k3 = jax.random.split(key, 3)

    # Small BERT-pooler-like shapes; exact-precision path (f32 compute).
    B, S, H = 2, 8, 32
    hidden_states = jax.random.normal(k1, (B, S, H), dtype=jnp.float32)
    weight = jax.random.normal(k2, (H, H), dtype=jnp.float32) * 0.02
    bias = jax.random.normal(k3, (H,), dtype=jnp.float32) * 0.02

    out = jax.block_until_ready(
        bert_pooler(hidden_states, weight, bias, compute_dtype=jnp.float32))
    ref = jnp.tanh(hidden_states[:, 0] @ weight.T + bias)
    assert out.shape == (B, H)
    assert jnp.allclose(out, ref, atol=1e-4, rtol=1e-4), float(jnp.max(jnp.abs(out - ref)))

    # Default bf16-compute path with >= 2 weight tiles (pipelined / dual-TC path).
    k4, k5, k6 = jax.random.split(jax.random.PRNGKey(1), 3)
    B2, S2, H2 = 4, 8, 256
    hs2 = jax.random.normal(k4, (B2, S2, H2), dtype=jnp.float32)
    w2 = jax.random.normal(k5, (H2, H2), dtype=jnp.float32) * 0.02
    b2 = jax.random.normal(k6, (H2,), dtype=jnp.float32) * 0.02
    out2 = jax.block_until_ready(bert_pooler(hs2, w2, b2))   # auto tn=128 -> grid=(2, 1)
    ref2_bf16 = jnp.tanh(
        jnp.dot(hs2[:, 0].astype(jnp.bfloat16), w2.T.astype(jnp.bfloat16),
                preferred_element_type=jnp.float32) + b2)
    ref2_f32 = jnp.tanh(hs2[:, 0] @ w2.T + b2)
    assert out2.shape == (B2, H2)
    assert jnp.allclose(out2, ref2_bf16, atol=1e-3, rtol=1e-3), \
        float(jnp.max(jnp.abs(out2 - ref2_bf16)))
    assert jnp.allclose(out2, ref2_f32, atol=3e-2, rtol=3e-2), \
        float(jnp.max(jnp.abs(out2 - ref2_f32)))

    print("KERNEL_OK")
</pallas_src>

<mosaic_0001>
module attributes {stable_mosaic.version = 11 : i64} {
  func.func @pooler_kernel(%arg0: i32, %arg1: i32, %arg2: memref<2x32xf32, #tpu.memory_space<vmem>>, %arg3: memref<32x32xf32, #tpu.memory_space<vmem>>, %arg4: memref<1x32xf32, #tpu.memory_space<vmem>>, %arg5: memref<2x32xf32, #tpu.memory_space<vmem>>) attributes {dimension_semantics = [#tpu.dimension_semantics<parallel>, #tpu.dimension_semantics<parallel>], iteration_bounds = array<i64: 1, 1>, scalar_prefetch = 0 : i64, scratch_operands = 0 : i64, tpu.core_type = #tpu.core_type<tc>, window_params = [{transform_indices = @transform_0, window_bounds = array<i64: 2, 32>}, {transform_indices = @transform_1, window_bounds = array<i64: 32, 32>}, {pipeline_mode = #tpu.pipeline_mode<synchronous>, transform_indices = @transform_2, window_bounds = array<i64: 1, 32>}, {transform_indices = @transform_3, window_bounds = array<i64: 2, 32>}]} {
    %c0 = arith.constant 0 : index
    %c0_0 = arith.constant 0 : index
    %0 = vector.load %arg2[%c0, %c0_0] : memref<2x32xf32, #tpu.memory_space<vmem>>, vector<2x32xf32>
    %c0_1 = arith.constant 0 : index
    %c0_2 = arith.constant 0 : index
    %1 = vector.load %arg3[%c0_1, %c0_2] : memref<32x32xf32, #tpu.memory_space<vmem>>, vector<32x32xf32>
    %cst = arith.constant dense<0.000000e+00> : vector<2x32xf32>
    %2 = tpu.matmul %0, %1, %cst {dimension_numbers = #tpu.dot_dimension_numbers<[1], [0], [0], [1], [0, 0, 1, 1], [], []>} : vector<2x32xf32>, vector<32x32xf32>, vector<2x32xf32> -> vector<2x32xf32>
    %3 = arith.index_cast %arg0 : i32 to index
    %c0_3 = arith.constant 0 : index
    %4 = vector.load %arg4[%3, %c0_3] : memref<1x32xf32, #tpu.memory_space<vmem>>, vector<1x32xf32>
    %5 = vector.broadcast %4 : vector<1x32xf32> to vector<2x32xf32>
    %6 = arith.addf %2, %5 : vector<2x32xf32>
    %7 = math.tanh %6 : vector<2x32xf32>
    %c0_4 = arith.constant 0 : index
    %c0_5 = arith.constant 0 : index
    %8 = vector.load %arg5[%c0_4, %c0_5] : memref<2x32xf32, #tpu.memory_space<vmem>>, vector<2x32xf32>
    tpu.vector_store %arg5[%c0_4, %c0_5], %7 {strides = array<i32>} : memref<2x32xf32, #tpu.memory_space<vmem>>, vector<2x32xf32>,
    return
  }
  func.func @transform_0(%arg0: i32, %arg1: i32) -> (i32, i32) {
    %c0_i32 = arith.constant 0 : i32
    %c0_i32_0 = arith.constant 0 : i32
    return %arg1, %c0_i32 : i32, i32
  }
  func.func @transform_1(%arg0: i32, %arg1: i32) -> (i32, i32) {
    %c0_i32 = arith.constant 0 : i32
    %c0_i32_0 = arith.constant 0 : i32
    return %c0_i32, %arg0 : i32, i32
  }
  func.func @transform_2(%arg0: i32, %arg1: i32) -> (i32, i32) {
    %c0_i32 = arith.constant 0 : i32
    %c0_i32_0 = arith.constant 0 : i32
    %c0_i32_1 = arith.constant 0 : i32
    return %c0_i32, %c0_i32_0 : i32, i32
  }
  func.func @transform_3(%arg0: i32, %arg1: i32) -> (i32, i32) {
    %c0_i32 = arith.constant 0 : i32
    return %arg1, %arg0 : i32, i32
  }
}

</mosaic_0001>

<llo_original>
// kernel: tpu_custom_call.1
$region0: #{tpu_custom_call.1}
  #allocation0 [shape = 'u32[]', space=smem, size = 0x4, offset = 0x4, fixed_abs, tag = 'smem constant byte address 0x4 - core index']
  #allocation1 [shape = 'u32[144,128]{1,0:T(1,128)}', space=vmem, size = 0x12000, scoped, tag = 'internal scratch']
  %s0 = inlined_call_operand.hbm [shape: f32[2,32], index: 0, kind: input, shape index: {}]
  %s1 = inlined_call_operand.hbm [shape: f32[32,32], index: 1, kind: input, shape index: {}]
  %s2 = inlined_call_operand.vmem [shape: f32[1,32], index: 2, kind: input, shape index: {}]
  %s3 = inlined_call_operand.hbm [shape: f32[2,32], index: 3, kind: output, shape index: {}]
  %s4 = sld [smem:[#allocation0]]
  $region30: #{tpu_custom_call.1} parent=0
    _
  %s6 = ssub.s32 1, %s4
  %s7 = scalar_select 0, %s6, %s4
  $region1: #{tpu_custom_call.1} parent=0
    #allocation2 [shape = 'u8[1024]{0}', space=vmem, size = 0x400, scoped, tag = 'input window, operand 0, single buffered']
    #allocation3 [shape = 's32[1]{0}', space=sflag, size = 0x4, scoped, tag = 'scoped memory for tpu_custom_call.1']
    #allocation4 [shape = 's32[1]{0}', space=sflag, size = 0x4, scoped, tag = 'scoped memory for tpu_custom_call.1']
    #allocation5 [shape = 'u8[16384]{0}', space=vmem, size = 0x4000, scoped, tag = 'input window, operand 1, single buffered']
    #allocation6 [shape = 's32[1]{0}', space=sflag, size = 0x4, scoped, tag = 'scoped memory for tpu_custom_call.1']
    #allocation7 [shape = 'u8[1024]{0}', space=vmem, size = 0x400, scoped, tag = 'output window, operand 0, single buffered']
    %8 = vsyncpa [#allocation3], 0
    %9 = vsyncpa [#allocation6], 0
    %10 = vsyncpa [#allocation4], 0
    // Predicated region
    $region2: #{tpu_custom_call.1} parent=1 // pred_check
      _
    $region3: #{tpu_custom_call.1} parent=1 // pred_check_branch
      %12 = sbr.rel (0) target = $region5
    $region4: #{tpu_custom_call.1} parent=1 // pred_region
      %s14 = ssub.s32 32, 32
      %15 = vsyncadd [#allocation3], %s14
      %s17 = sshll.u32 [#allocation2], 4
      %s18 = int_to_ptr.vmem [resolvable:$true] %s17
      %20 = dma.hbm_to_vmem [thread:$0]  %s0, 32, %s18, [#allocation3]
    $region5: #{tpu_custom_call.1} parent=1 // pred_fallthru
      _
    // Predicated region
    $region6: #{tpu_custom_call.1} parent=1 // pred_check
      _
    $region7: #{tpu_custom_call.1} parent=1 // pred_check_branch
      %22 = sbr.rel (0) target = $region9
    $region8: #{tpu_custom_call.1} parent=1 // pred_region
      %s24 = ssub.s32 512, 512
      %25 = vsyncadd [#allocation6], %s24
      %s26 = sshll.u32 [#allocation5], 4
      %s27 = int_to_ptr.vmem [resolvable:$true] %s26
      %32 = dma.hbm_to_vmem [thread:$0]  %s1, 512, %s27, [#allocation6], 128, 128, 8
    $region9: #{tpu_custom_call.1} parent=1 // pred_fallthru
      _
    // Predicated region
    $region10: #{tpu_custom_call.1} parent=1 // pred_check
      _
    $region11: #{tpu_custom_call.1} parent=1 // pred_check_branch
      %34 = sbr.rel (0) target = $region13
    $region12: #{tpu_custom_call.1} parent=1 // pred_region
      _
    $region13: #{tpu_custom_call.1} parent=1 // pred_fallthru
      _
    // Predicated region
    $region14: #{tpu_custom_call.1} parent=1 // pred_check
      _
    $region15: #{tpu_custom_call.1} parent=1 // pred_check_branch
      %36 = sbr.rel (0) target = $region17
    $region16: #{tpu_custom_call.1} parent=1 // pred_region
      %37 = dma.done [#allocation3], 32
    $region17: #{tpu_custom_call.1} parent=1 // pred_fallthru
      _
    // Predicated region
    $region18: #{tpu_custom_call.1} parent=1 // pred_check
      _
    $region19: #{tpu_custom_call.1} parent=1 // pred_check_branch
      %39 = sbr.rel (0) target = $region21
    $region20: #{tpu_custom_call.1} parent=1 // pred_region
      %40 = dma.done [#allocation6], 512
    $region21: #{tpu_custom_call.1} parent=1 // pred_fallthru
      _
    %v41 = vld [vmem:[#allocation2] sm:$0x3]
    %v42 = vld [vmem:[#allocation5] sm:$0xff]
    %v43 = vld [vmem:[#allocation5 + $0x8] sm:$0xff]
    %v44 = vld [vmem:[#allocation5 + $0x10] sm:$0xff]
    %v45 = vld [vmem:[#allocation5 + $0x18] sm:$0xff]
    %v46 = vld [vmem:[%s2] sm:$0x1]
    %v48 = vlaneseq
    %v49 = vshrl.u32 %v48, 7
    %v50 = vsub.s32 0, %v49
    %v51 = vrot.slane %v46, %v50
    %vm53 = vcmask 261120
    %v55 = vsel %vm53, %v41, 0
    %57 = vmatprep.subr.mxu0 0.0
    %58 = vmatpush1.msra.mxu0 0.0
    %59 = vmatprep.subr.mxu0 0.0
    %60 = vmatpush1.msra.mxu0 0.0
    %61 = vmatprep.subr.mxu0 0.0
    %62 = vmatpush1.msra.mxu0 0.0
    %63 = vmatprep.subr.mxu0 0.0
    %64 = vmatpush1.msra.mxu0 0.0
    %65 = vmatprep.subr.mxu0 0.0
    %66 = vmatpush1.msra.mxu0 0.0
    %67 = vmatprep.subr.mxu0 0.0
    %68 = vmatpush1.msra.mxu0 0.0
    %69 = vmatprep.subr.mxu0 0.0
    %70 = vmatpush1.msra.mxu0 0.0
    %71 = vmatprep.subr.mxu0 0.0
    %72 = vmatpush1.msra.mxu0 0.0
    %73 = vmatprep.subr.mxu0 0.0
    %74 = vmatpush1.msra.mxu0 0.0
    %75 = vmatprep.subr.mxu0 0.0
    %76 = vmatpush1.msra.mxu0 0.0
    %77 = vmatprep.subr.mxu0 0.0
    %78 = vmatpush1.msra.mxu0 0.0
    %79 = vmatprep.subr.mxu0 0.0
    %80 = vmatpush1.msra.mxu0 0.0
    %81 = vmatprep.subr.mxu0 0.0
    %82 = vmatpush1.msra.mxu0 %v45
    %83 = vmatprep.subr.mxu0 0.0
    %84 = vmatpush1.msra.mxu0 %v44
    %85 = vmatprep.subr.mxu0 0.0
    %86 = vmatpush1.msra.mxu0 %v43
    %87 = vmatprep.subr.mxu0 0.0
    %88 = vmatpush1.msra.mxu0 %v42
    %89 = vmatprep.subr.mxu0 0.0
    %90 = vmatpush2.msra.mxu0 0.0
    %91 = vmatprep.subr.mxu0 0.0
    %92 = vmatpush2.msra.mxu0 0.0
    %93 = vmatprep.subr.mxu0 0.0
    %94 = vmatpush2.msra.mxu0 0.0
    %95 = vmatprep.subr.mxu0 0.0
    %96 = vmatpush2.msra.mxu0 0.0
    %97 = vmatprep.subr.mxu0 0.0
    %98 = vmatpush2.msra.mxu0 0.0
    %99 = vmatprep.subr.mxu0 0.0
    %100 = vmatpush2.msra.mxu0 0.0
    %101 = vmatprep.subr.mxu0 0.0
    %102 = vmatpush2.msra.mxu0 0.0
    %103 = vmatprep.subr.mxu0 0.0
    %104 = vmatpush2.msra.mxu0 0.0
    %105 = vmatprep.subr.mxu0 0.0
    %106 = vmatpush2.msra.mxu0 0.0
    %107 = vmatprep.subr.mxu0 0.0
    %108 = vmatpush2.msra.mxu0 0.0
    %109 = vmatprep.subr.mxu0 0.0
    %110 = vmatpush2.msra.mxu0 0.0
    %111 = vmatprep.subr.mxu0 0.0
    %112 = vmatpush2.msra.mxu0 0.0
    %113 = vmatprep.subr.mxu0 0.0
    %114 = vmatpush2.msra.mxu0 0.0
    %115 = vmatprep.subr.mxu0 0.0
    %116 = vmatpush2.msra.mxu0 0.0
    %117 = vmatprep.subr.mxu0 0.0
    %118 = vmatpush2.msra.mxu0 0.0
    %119 = vmatprep.subr.mxu0 0.0
    %120 = vmatpush2.msra.mxu0 0.0
    %121 = vmatprep.mubr.f32.mxu0 0.0
    %122 = vmatmul.mubr.f32.gmra.mxu0 %v55
    %v123 = vpop.f32.mrf.mxu0
    %v124 = vadd.f32 %v51, %v123
    %v125 = vpop.f32.mrf.mxu0
    %126 = vdwg.mxu0
    %v127 = vtanh.pop %v124
    %vm128 = vcmask 254976
    %129 = vst.msk [vmem:[#allocation7] sm:$0x3] %vm128, %v127
    // Predicated region
    $region22: #{tpu_custom_call.1} parent=1 // pred_check
      _
    $region23: #{tpu_custom_call.1} parent=1 // pred_check_branch
      %131 = sbr.rel (0) target = $region25
    $region24: #{tpu_custom_call.1} parent=1 // pred_region
      %s133 = ssub.s32 32, 32
      %134 = vsyncadd [#allocation4], %s133
      %s136 = sshll.u32 [#allocation7], 4
      %s137 = int_to_ptr.vmem [resolvable:$true] %s136
      %139 = dma.vmem_to_hbm [thread:$0]  %s137, 32, %s3, [#allocation4]
    $region25: #{tpu_custom_call.1} parent=1 // pred_fallthru
      _
    // Predicated region
    $region26: #{tpu_custom_call.1} parent=1 // pred_check
      _
    $region27: #{tpu_custom_call.1} parent=1 // pred_check_branch
      %141 = sbr.rel (0) target = $region29
    $region28: #{tpu_custom_call.1} parent=1 // pred_region
      %142 = dma.done [#allocation4], 32
    $region29: #{tpu_custom_call.1} parent=1 // pred_fallthru
      _
    %143 = vsyncpa [#allocation3], 1
    %144 = vsyncpa [#allocation6], 1
    %145 = vsyncpa [#allocation4], 1

</llo_original>
